<compile_context>
chip_gen: v5e
topology: v5e:2x2
jax: 0.10.0
libtpu: 0.0.40
codegen_flags: <defaults>
</compile_context>

<pallas_src>
import jax
import jax.numpy as jnp
from jax.experimental import pallas as pl
from jax.experimental.pallas import tpu as pltpu


def _pearson_rows_kernel(x_ref, r_ref, out_ref):
    """Write per-row (1 - corr) for this row tile. No cross-step state."""
    x = x_ref[...].astype(jnp.float32)
    r = r_ref[...].astype(jnp.float32)

    inv_d = jnp.float32(1.0 / x.shape[-1])

    # Lane-axis (XLU) reductions only; no (tm, D) centered temporaries.
    sx = jnp.sum(x, axis=1, keepdims=True)
    sr = jnp.sum(r, axis=1, keepdims=True)
    sxr = jnp.sum(x * r, axis=1, keepdims=True)
    sxx = jnp.sum(x * x, axis=1, keepdims=True)
    srr = jnp.sum(r * r, axis=1, keepdims=True)

    num = sxr - sx * sr * inv_d            # sum(vx*vy)
    vxx = sxx - sx * sx * inv_d            # sum(vx*vx)
    vrr = srr - sr * sr * inv_d            # sum(vy*vy)

    # corr = num / (||vx|| * ||vy||), fused as num * rsqrt(vxx*vrr) (EUP slot).
    # NOTE: like the PyTorch module, a zero-variance row gives 0/0 -> NaN.
    corr = num * jax.lax.rsqrt(vxx * vrr)
    out_ref[...] = jnp.float32(1.0) - corr


def _round_up(v, m):
    return (v + m - 1) // m * m


def pearson_loss(recon_x, x, feature_dim, *, max_tile_rows=1024,
                 vmem_input_budget_bytes=24 * 1024 * 1024):
    """Pallas implementation of Pearson_loss.forward(recon_x, x)."""
    x2 = x.reshape(-1, feature_dim)
    r2 = recon_x.reshape(-1, feature_dim)
    n_rows, d = x2.shape
    assert r2.shape == (n_rows, d)

    itemsize = max(jnp.dtype(x2.dtype).itemsize, jnp.dtype(r2.dtype).itemsize)
    # Sublane packing granularity (f32 -> 8, bf16/f16 -> 16, 8-bit -> 32).
    sublane = max(8, 32 // itemsize)

    # Largest row tile whose double-buffered input footprint
    # (2 inputs x 2 buffers x tile_rows x d x itemsize) stays within budget;
    # <= ~24 MiB keeps pipelining headroom even on v7x's 64 MiB VMEM.
    tr_cap = vmem_input_budget_bytes // (4 * d * itemsize)
    tile_rows = max(sublane, min(max_tile_rows, tr_cap) // sublane * sublane)
    # Never bigger than the (sublane-padded) row count.
    tile_rows = min(tile_rows, _round_up(n_rows, sublane))

    # Pad rows so the grid divides evenly; padded rows are sliced off before
    # the final mean, so any NaN they produce never reaches the result.
    n_tiles = pl.cdiv(n_rows, tile_rows)
    n_rows_pad = n_tiles * tile_rows
    if n_rows_pad != n_rows:
        pad = n_rows_pad - n_rows
        x2 = jnp.pad(x2, ((0, pad), (0, 0)))
        r2 = jnp.pad(r2, ((0, pad), (0, 0)))

    in_block_bytes = tile_rows * d * itemsize
    footprint = 4 * in_block_bytes + 4 * tile_rows * 4   # inputs + tiny output
    vmem_limit = int(min(64 << 20, max(32 << 20, footprint + (8 << 20))))

    per_row = pl.pallas_call(
        _pearson_rows_kernel,
        out_shape=jax.ShapeDtypeStruct((n_rows_pad, 1), jnp.float32),
        grid=(n_tiles,),
        in_specs=[
            pl.BlockSpec((tile_rows, d), lambda i: (i, 0)),  # x tile
            pl.BlockSpec((tile_rows, d), lambda i: (i, 0)),  # recon_x tile
        ],
        out_specs=pl.BlockSpec((tile_rows, 1), lambda i: (i, 0)),
        compiler_params=pltpu.CompilerParams(
            dimension_semantics=("parallel",),   # no cross-step accumulator
            vmem_limit_bytes=vmem_limit,
        ),
    )(x2, r2)

    # Final reduction over the real rows (tiny; done in plain JAX).
    return jnp.mean(per_row[:n_rows, 0])


def pearson_loss_ref(recon_x, x, feature_dim):
    """Pure-JAX reference matching the PyTorch forward exactly."""
    r = recon_x.reshape(-1, feature_dim).astype(jnp.float32)
    xx = x.reshape(-1, feature_dim).astype(jnp.float32)
    vx = xx - jnp.mean(xx, axis=1, keepdims=True)
    vy = r - jnp.mean(r, axis=1, keepdims=True)
    corr = jnp.sum(vx * vy, axis=1) / (
        jnp.linalg.norm(vx, axis=1) * jnp.linalg.norm(vy, axis=1)
    )
    return jnp.mean(1.0 - corr)


if __name__ == "__main__":
    # Module has no learned parameters; only feature_dim from __init__.
    feature_dim = 128

    key = jax.random.PRNGKey(0)
    k1, k2 = jax.random.split(key)
    # Inputs of shape (2, 4, 16, 16) -> viewed as (16, 128) rows x feature_dim.
    x = jax.random.normal(k1, (2, 4, 16, 16), dtype=jnp.float32)
    recon_x = jax.random.normal(k2, (2, 4, 16, 16), dtype=jnp.float32)

    loss = pearson_loss(recon_x, x, feature_dim)
    loss = jax.block_until_ready(loss)

    ref = pearson_loss_ref(recon_x, x, feature_dim)
    assert jnp.allclose(loss, ref, atol=1e-5, rtol=1e-5), (loss, ref)

    print("KERNEL_OK")
</pallas_src>

<mosaic_0001>
module attributes {stable_mosaic.version = 11 : i64} {
  func.func @_pearson_rows_kernel(%arg0: i32, %arg1: memref<16x128xf32, #tpu.memory_space<vmem>>, %arg2: memref<16x128xf32, #tpu.memory_space<vmem>>, %arg3: memref<16x1xf32, #tpu.memory_space<vmem>>) attributes {dimension_semantics = [#tpu.dimension_semantics<parallel>], iteration_bounds = array<i64: 1>, scalar_prefetch = 0 : i64, scratch_operands = 0 : i64, tpu.core_type = #tpu.core_type<tc>, window_params = [{transform_indices = @transform_0, window_bounds = array<i64: 16, 128>}, {transform_indices = @transform_1, window_bounds = array<i64: 16, 128>}, {transform_indices = @transform_2, window_bounds = array<i64: 16, 1>}]} {
    %c0 = arith.constant 0 : index
    %c0_0 = arith.constant 0 : index
    %0 = vector.load %arg1[%c0, %c0_0] : memref<16x128xf32, #tpu.memory_space<vmem>>, vector<16x128xf32>
    %c0_1 = arith.constant 0 : index
    %c0_2 = arith.constant 0 : index
    %1 = vector.load %arg2[%c0_1, %c0_2] : memref<16x128xf32, #tpu.memory_space<vmem>>, vector<16x128xf32>
    %cst = arith.constant dense<0.000000e+00> : vector<16xf32>
    %2 = vector.multi_reduction <add>, %0, %cst [1] : vector<16x128xf32> to vector<16xf32>
    %3 = vector.shape_cast %2 : vector<16xf32> to vector<16x1xf32>
    %cst_3 = arith.constant dense<0.000000e+00> : vector<16xf32>
    %4 = vector.multi_reduction <add>, %1, %cst_3 [1] : vector<16x128xf32> to vector<16xf32>
    %5 = vector.shape_cast %4 : vector<16xf32> to vector<16x1xf32>
    %6 = arith.mulf %0, %1 : vector<16x128xf32>
    %cst_4 = arith.constant dense<0.000000e+00> : vector<16xf32>
    %7 = vector.multi_reduction <add>, %6, %cst_4 [1] : vector<16x128xf32> to vector<16xf32>
    %8 = vector.shape_cast %7 : vector<16xf32> to vector<16x1xf32>
    %9 = arith.mulf %0, %0 : vector<16x128xf32>
    %cst_5 = arith.constant dense<0.000000e+00> : vector<16xf32>
    %10 = vector.multi_reduction <add>, %9, %cst_5 [1] : vector<16x128xf32> to vector<16xf32>
    %11 = vector.shape_cast %10 : vector<16xf32> to vector<16x1xf32>
    %12 = arith.mulf %1, %1 : vector<16x128xf32>
    %cst_6 = arith.constant dense<0.000000e+00> : vector<16xf32>
    %13 = vector.multi_reduction <add>, %12, %cst_6 [1] : vector<16x128xf32> to vector<16xf32>
    %14 = vector.shape_cast %13 : vector<16xf32> to vector<16x1xf32>
    %15 = arith.mulf %3, %5 : vector<16x1xf32>
    %cst_7 = arith.constant 7.812500e-03 : f32
    %16 = vector.broadcast %cst_7 : f32 to vector<16x1xf32>
    %17 = arith.mulf %15, %16 : vector<16x1xf32>
    %18 = arith.subf %8, %17 : vector<16x1xf32>
    %19 = arith.mulf %3, %3 : vector<16x1xf32>
    %cst_8 = arith.constant 7.812500e-03 : f32
    %20 = vector.broadcast %cst_8 : f32 to vector<16x1xf32>
    %21 = arith.mulf %19, %20 : vector<16x1xf32>
    %22 = arith.subf %11, %21 : vector<16x1xf32>
    %23 = arith.mulf %5, %5 : vector<16x1xf32>
    %cst_9 = arith.constant 7.812500e-03 : f32
    %24 = vector.broadcast %cst_9 : f32 to vector<16x1xf32>
    %25 = arith.mulf %23, %24 : vector<16x1xf32>
    %26 = arith.subf %14, %25 : vector<16x1xf32>
    %27 = arith.mulf %22, %26 : vector<16x1xf32>
    %28 = math.rsqrt %27 : vector<16x1xf32>
    %29 = arith.mulf %18, %28 : vector<16x1xf32>
    %cst_10 = arith.constant 1.000000e+00 : f32
    %30 = vector.broadcast %cst_10 : f32 to vector<16x1xf32>
    %31 = arith.subf %30, %29 : vector<16x1xf32>
    %c0_11 = arith.constant 0 : index
    %c0_12 = arith.constant 0 : index
    %32 = vector.load %arg3[%c0_11, %c0_12] : memref<16x1xf32, #tpu.memory_space<vmem>>, vector<16x1xf32>
    tpu.vector_store %arg3[%c0_11, %c0_12], %31 {strides = array<i32>} : memref<16x1xf32, #tpu.memory_space<vmem>>, vector<16x1xf32>,
    return
  }
  func.func @transform_0(%arg0: i32) -> (i32, i32) {
    %c0_i32 = arith.constant 0 : i32
    %c0_i32_0 = arith.constant 0 : i32
    return %arg0, %c0_i32 : i32, i32
  }
  func.func @transform_1(%arg0: i32) -> (i32, i32) {
    %c0_i32 = arith.constant 0 : i32
    %c0_i32_0 = arith.constant 0 : i32
    return %arg0, %c0_i32 : i32, i32
  }
  func.func @transform_2(%arg0: i32) -> (i32, i32) {
    %c0_i32 = arith.constant 0 : i32
    %c0_i32_0 = arith.constant 0 : i32
    return %arg0, %c0_i32 : i32, i32
  }
}

</mosaic_0001>

<llo_original>
// kernel: tpu_custom_call.1
$region0: #{tpu_custom_call.1}
  #allocation0 [shape = 'u32[]', space=smem, size = 0x4, offset = 0x4, fixed_abs, tag = 'smem constant byte address 0x4 - core index']
  #allocation1 [shape = 'u32[72,128]{1,0:T(1,128)}', space=vmem, size = 0x9000, scoped, tag = 'internal scratch']
  %s0 = inlined_call_operand.hbm [shape: f32[16,128], index: 0, kind: input, shape index: {}]
  %s1 = inlined_call_operand.hbm [shape: f32[16,128], index: 1, kind: input, shape index: {}]
  %s2 = inlined_call_operand.vmem [shape: f32[16,1], index: 2, kind: output, shape index: {}]
  %s3 = sld [smem:[#allocation0]]
  $region26: #{tpu_custom_call.1} parent=0
    _
  %s5 = ssub.s32 1, %s3
  %s6 = scalar_select 0, %s5, %s3
  $region1: #{tpu_custom_call.1} parent=0
    #allocation2 [shape = 'u8[8192]{0}', space=vmem, size = 0x2000, scoped, tag = 'input window, operand 0, single buffered']
    #allocation3 [shape = 's32[1]{0}', space=sflag, size = 0x4, scoped, tag = 'scoped memory for tpu_custom_call.1']
    #allocation4 [shape = 'u8[8192]{0}', space=vmem, size = 0x2000, scoped, tag = 'input window, operand 1, single buffered']
    #allocation5 [shape = 's32[1]{0}', space=sflag, size = 0x4, scoped, tag = 'scoped memory for tpu_custom_call.1']
    %7 = vsyncpa [#allocation3], 0
    %8 = vsyncpa [#allocation5], 0
    // Predicated region
    $region2: #{tpu_custom_call.1} parent=1 // pred_check
      _
    $region3: #{tpu_custom_call.1} parent=1 // pred_check_branch
      %10 = sbr.rel (0) target = $region5
    $region4: #{tpu_custom_call.1} parent=1 // pred_region
      %12 = vsyncadd [#allocation3], 0
      %s13 = sshll.u32 %s0, 4
      %s14 = int_to_ptr.hbm [resolvable:$true] %s13
      %s15 = sshll.u32 [#allocation2], 4
      %s16 = int_to_ptr.vmem [resolvable:$true] %s15
      %21 = dma.hbm_to_vmem [thread:$0]  %s14, 256, %s16, [#allocation3], 128, 128, 8
    $region5: #{tpu_custom_call.1} parent=1 // pred_fallthru
      _
    // Predicated region
    $region6: #{tpu_custom_call.1} parent=1 // pred_check
      _
    $region7: #{tpu_custom_call.1} parent=1 // pred_check_branch
      %23 = sbr.rel (0) target = $region9
    $region8: #{tpu_custom_call.1} parent=1 // pred_region
      %25 = vsyncadd [#allocation5], 0
      %s26 = sshll.u32 %s1, 4
      %s27 = int_to_ptr.hbm [resolvable:$true] %s26
      %s28 = sshll.u32 [#allocation4], 4
      %s29 = int_to_ptr.vmem [resolvable:$true] %s28
      %34 = dma.hbm_to_vmem [thread:$0]  %s27, 256, %s29, [#allocation5], 128, 128, 8
    $region9: #{tpu_custom_call.1} parent=1 // pred_fallthru
      _
    // Predicated region
    $region10: #{tpu_custom_call.1} parent=1 // pred_check
      _
    $region11: #{tpu_custom_call.1} parent=1 // pred_check_branch
      %36 = sbr.rel (0) target = $region13
    $region12: #{tpu_custom_call.1} parent=1 // pred_region
      %38 = dma.done [#allocation3], 256
    $region13: #{tpu_custom_call.1} parent=1 // pred_fallthru
      _
    // Predicated region
    $region14: #{tpu_custom_call.1} parent=1 // pred_check
      _
    $region15: #{tpu_custom_call.1} parent=1 // pred_check_branch
      %40 = sbr.rel (0) target = $region17
    $region16: #{tpu_custom_call.1} parent=1 // pred_region
      %42 = dma.done [#allocation5], 256
    $region17: #{tpu_custom_call.1} parent=1 // pred_fallthru
      _
    %v43 = vld [vmem:[#allocation2] sm:$0xff]
    %v44 = vld [vmem:[#allocation2 + $0x8] sm:$0xff]
    %v45 = vld [vmem:[#allocation4] sm:$0xff]
    %v46 = vld [vmem:[#allocation4 + $0x8] sm:$0xff]
    %47 = vadd.xlane.f32.xlu0 %v43
    %v48 = vpop.xlane.xlu0 %47
    %49 = vadd.xlane.f32.xlu0 %v44
    %v50 = vpop.xlane.xlu0 %49
    %51 = vadd.xlane.f32.xlu0 %v45
    %v52 = vpop.xlane.xlu0 %51
    %53 = vadd.xlane.f32.xlu0 %v46
    %v54 = vpop.xlane.xlu0 %53
    %v55 = vmul.f32 %v43, %v45
    %v56 = vmul.f32 %v44, %v46
    %57 = vadd.xlane.f32.xlu0 %v55
    %v58 = vpop.xlane.xlu0 %57
    %59 = vadd.xlane.f32.xlu0 %v56
    %v60 = vpop.xlane.xlu0 %59
    %v61 = vmul.f32 %v43, %v43
    %v62 = vmul.f32 %v44, %v44
    %63 = vadd.xlane.f32.xlu0 %v61
    %v64 = vpop.xlane.xlu0 %63
    %65 = vadd.xlane.f32.xlu0 %v62
    %v66 = vpop.xlane.xlu0 %65
    %v67 = vmul.f32 %v45, %v45
    %v68 = vmul.f32 %v46, %v46
    %69 = vadd.xlane.f32.xlu0 %v67
    %v70 = vpop.xlane.xlu0 %69
    %71 = vadd.xlane.f32.xlu0 %v68
    %v72 = vpop.xlane.xlu0 %71
    %v73 = vmul.f32 %v48, %v52
    %v74 = vmul.f32 %v50, %v54
    %v75 = vmul.f32 %v73, 0.0078125
    %v76 = vmul.f32 %v74, 0.0078125
    %v77 = vsub.f32 %v58, %v75
    %v78 = vsub.f32 %v60, %v76
    %v79 = vmul.f32 %v48, %v48
    %v80 = vmul.f32 %v50, %v50
    %v81 = vmul.f32 %v79, 0.0078125
    %v82 = vmul.f32 %v80, 0.0078125
    %v83 = vsub.f32 %v64, %v81
    %v84 = vsub.f32 %v66, %v82
    %v85 = vmul.f32 %v52, %v52
    %v86 = vmul.f32 %v54, %v54
    %v87 = vmul.f32 %v85, 0.0078125
    %v88 = vmul.f32 %v86, 0.0078125
    %v89 = vsub.f32 %v70, %v87
    %v90 = vsub.f32 %v72, %v88
    %v91 = vmul.f32 %v83, %v89
    %v92 = vmul.f32 %v84, %v90
    %v93 = vrsqrt.pop %v91
    %v94 = vmul.f32 %v93, %v91
    %v95 = vmul.f32 %v94, %v93
    %v96 = vmul.f32 0.5, %v95
    %v97 = vsub.f32 1.5, %v96
    %v98 = vmul.f32 %v93, %v97
    %vm99 = vweird.f32 %v91
    %vm100 = vweird.f32 %v93
    %vm101 = vmor %vm99, %vm100
    %v102 = vsel %vm101, %v93, %v98
    %v103 = vrsqrt.pop %v92
    %v104 = vmul.f32 %v103, %v92
    %v105 = vmul.f32 %v104, %v103
    %v106 = vmul.f32 0.5, %v105
    %v107 = vsub.f32 1.5, %v106
    %v108 = vmul.f32 %v103, %v107
    %vm109 = vweird.f32 %v92
    %vm110 = vweird.f32 %v103
    %vm111 = vmor %vm109, %vm110
    %v112 = vsel %vm111, %v103, %v108
    %v113 = vmul.f32 %v77, %v102
    %v114 = vmul.f32 %v78, %v112
    %v115 = vsub.f32 1.0, %v113
    %v116 = vsub.f32 1.0, %v114
    %vm117 = vcmask 7168
    %118 = vst.msk [vmem:[%s2] sm:$0xff] %vm117, %v115
    %119 = vst.msk [vmem:[%s2 + $0x8] sm:$0xff] %vm117, %v116
    // Predicated region
    $region18: #{tpu_custom_call.1} parent=1 // pred_check
      _
    $region19: #{tpu_custom_call.1} parent=1 // pred_check_branch
      %121 = sbr.rel (0) target = $region21
    $region20: #{tpu_custom_call.1} parent=1 // pred_region
      _
    $region21: #{tpu_custom_call.1} parent=1 // pred_fallthru
      _
    // Predicated region
    $region22: #{tpu_custom_call.1} parent=1 // pred_check
      _
    $region23: #{tpu_custom_call.1} parent=1 // pred_check_branch
      %123 = sbr.rel (0) target = $region25
    $region24: #{tpu_custom_call.1} parent=1 // pred_region
      _
    $region25: #{tpu_custom_call.1} parent=1 // pred_fallthru
      _
    %124 = vsyncpa [#allocation3], 1
    %125 = vsyncpa [#allocation5], 1

</llo_original>
